<compile_context>
chip_gen: v6e
topology: v6e:2x2x1
jax: 0.10.0
libtpu: 0.0.40
codegen_flags: <defaults>
</compile_context>

<pallas_src>
import jax
import jax.numpy as jnp
from jax.experimental import pallas as pl
from jax.experimental.pallas import tpu as pltpu


def _dice_partial_kernel(p_ref, t_ref, num_ref, den_ref):
    # p_ref / t_ref: (R, S_TILE) VMEM blocks, R = N*C rows, lane-dense tile.
    p = jax.nn.sigmoid(p_ref[...].astype(jnp.float32))
    t = t_ref[...].astype(jnp.float32)
    # Per-row partial sums for this spatial tile.  The denominator uses a single
    # fused reduction over (p + t) instead of two separate reductions.
    num_ref[0] = jnp.sum(p * t, axis=1, keepdims=True)   # (R, 1)
    den_ref[0] = jnp.sum(p + t, axis=1, keepdims=True)   # (R, 1)


def _pick_spatial_tile(s):
    """Largest lane-dense (multiple-of-128) tile that divides s, else full s."""
    for tile in (4096, 2048, 1024, 512, 256, 128):
        if s % tile == 0:
            return tile
    return s   # fallback: one (possibly lane-masked) tile covering the full extent


def dice_loss_4mots(predict, target, *, num_classes=3, smooth=1.0, p=2,
                    reduction="mean", weight=None, ignore_index=None):
    """Forward pass of DiceLoss4MOTS. Returns a scalar float32 loss."""
    del p, reduction  # BinaryDiceLoss.forward never uses p; reduction path unused here.
    N, C, H, W = predict.shape
    assert C == num_classes
    assert target.shape == predict.shape

    S = H * W
    R = N * C
    s_tile = _pick_spatial_tile(S)
    n_tiles = S // s_tile

    # Free reshapes for contiguous NCHW layout: rows are (n, c) pairs, lanes are spatial.
    predict2 = predict.reshape(R, S)
    target2 = target.reshape(R, S)

    num_p, den_p = pl.pallas_call(
        _dice_partial_kernel,
        out_shape=(
            jax.ShapeDtypeStruct((n_tiles, R, 1), jnp.float32),
            jax.ShapeDtypeStruct((n_tiles, R, 1), jnp.float32),
        ),
        grid_spec=pltpu.PrefetchScalarGridSpec(
            num_scalar_prefetch=0,
            grid=(n_tiles,),
            in_specs=[
                pl.BlockSpec((R, s_tile), lambda t: (0, t)),
                pl.BlockSpec((R, s_tile), lambda t: (0, t)),
            ],
            out_specs=[
                pl.BlockSpec((1, R, 1), lambda t: (t, 0, 0)),
                pl.BlockSpec((1, R, 1), lambda t: (t, 0, 0)),
            ],
        ),
        compiler_params=pltpu.CompilerParams(
            dimension_semantics=("parallel",),
        ),
    )(predict2, target2)

    # ---- tiny JAX glue: finalize dice + match the torch loop / stack / NaN filter ----
    num = jnp.sum(num_p, axis=0)[:, 0].reshape(N, C)                    # sum(p*t) per (n, c)
    den = jnp.sum(den_p, axis=0)[:, 0].reshape(N, C) + jnp.float32(smooth)
    dice_score = 2.0 * num / den                                        # (N, C)
    losses = 1.0 - jnp.mean(dice_score, axis=0)                         # per-class loss (C,)

    if ignore_index is not None:
        keep = jnp.asarray([i for i in range(C) if i != ignore_index], jnp.int32)
        losses = losses[keep]
    # TODO(synk): weight path not implemented (the torch reference uses
    # `self.weights[i]` which does not exist — it would raise at runtime).
    assert weight is None

    valid = losses == losses                      # NaN filter (total_loss == total_loss)
    count = jnp.sum(valid).astype(jnp.float32)
    total = jnp.sum(jnp.where(valid, losses, 0.0))
    return total / count


def _reference(predict, target, smooth=1.0):
    """Pure-JAX reference of the torch forward (weight=None, ignore_index=None)."""
    p = jax.nn.sigmoid(predict.astype(jnp.float32))
    t = target.astype(jnp.float32)
    N, C = p.shape[0], p.shape[1]
    losses = []
    for i in range(C):
        pi = p[:, i].reshape(N, -1)
        ti = t[:, i].reshape(N, -1)
        num = jnp.sum(pi * ti, axis=1)
        den = jnp.sum(pi, axis=1) + jnp.sum(ti, axis=1) + smooth
        losses.append(1.0 - jnp.mean(2.0 * num / den))
    losses = jnp.stack(losses)
    valid = losses == losses
    return jnp.sum(jnp.where(valid, losses, 0.0)) / jnp.sum(valid)


if __name__ == "__main__":
    key = jax.random.PRNGKey(0)
    k1, k2 = jax.random.split(key)
    N, C, H, W = 2, 3, 16, 16                      # num_classes = 3 (module default)
    predict = jax.random.normal(k1, (N, C, H, W), dtype=jnp.float32)
    target = jax.random.bernoulli(k2, 0.5, (N, C, H, W)).astype(jnp.float32)

    loss = dice_loss_4mots(predict, target, num_classes=C, smooth=1.0)
    loss = jax.block_until_ready(loss)

    ref = jax.block_until_ready(_reference(predict, target, smooth=1.0))
    assert jnp.allclose(loss, ref, atol=1e-5, rtol=1e-5), (loss, ref)

    print("KERNEL_OK")
</pallas_src>

<mosaic_0001>
module attributes {stable_mosaic.version = 11 : i64} {
  func.func @_dice_partial_kernel(%arg0: i32, %arg1: memref<6x256xf32, #tpu.memory_space<vmem>>, %arg2: memref<6x256xf32, #tpu.memory_space<vmem>>, %arg3: memref<1x6x1xf32, #tpu.memory_space<vmem>>, %arg4: memref<1x6x1xf32, #tpu.memory_space<vmem>>) attributes {dimension_semantics = [#tpu.dimension_semantics<parallel>], iteration_bounds = array<i64: 1>, scalar_prefetch = 0 : i64, scratch_operands = 0 : i64, tpu.core_type = #tpu.core_type<tc>, window_params = [{transform_indices = @transform_0, window_bounds = array<i64: 6, 256>}, {transform_indices = @transform_1, window_bounds = array<i64: 6, 256>}, {transform_indices = @transform_2, window_bounds = array<i64: 1, 6, 1>}, {transform_indices = @transform_3, window_bounds = array<i64: 1, 6, 1>}]} {
    %c0 = arith.constant 0 : index
    %c0_0 = arith.constant 0 : index
    %0 = vector.load %arg1[%c0, %c0_0] : memref<6x256xf32, #tpu.memory_space<vmem>>, vector<6x256xf32>
    %1 = arith.negf %0 : vector<6x256xf32>
    %2 = math.exp %1 : vector<6x256xf32>
    %cst = arith.constant 1.000000e+00 : f32
    %3 = vector.broadcast %cst : f32 to vector<6x256xf32>
    %4 = arith.addf %3, %2 : vector<6x256xf32>
    %5 = arith.divf %3, %4 : vector<6x256xf32>
    %c0_1 = arith.constant 0 : index
    %c0_2 = arith.constant 0 : index
    %6 = vector.load %arg2[%c0_1, %c0_2] : memref<6x256xf32, #tpu.memory_space<vmem>>, vector<6x256xf32>
    %7 = arith.mulf %5, %6 : vector<6x256xf32>
    %cst_3 = arith.constant dense<0.000000e+00> : vector<6xf32>
    %8 = vector.multi_reduction <add>, %7, %cst_3 [1] : vector<6x256xf32> to vector<6xf32>
    %9 = vector.shape_cast %8 : vector<6xf32> to vector<6x1xf32>
    %c0_4 = arith.constant 0 : index
    %c0_5 = arith.constant 0 : index
    %c0_6 = arith.constant 0 : index
    %10 = vector.load %arg3[%c0_4, %c0_5, %c0_6] : memref<1x6x1xf32, #tpu.memory_space<vmem>>, vector<1x6x1xf32>
    %11 = vector.shape_cast %10 : vector<1x6x1xf32> to vector<6x1xf32>
    %12 = vector.shape_cast %9 : vector<6x1xf32> to vector<1x6x1xf32>
    tpu.vector_store %arg3[%c0_4, %c0_5, %c0_6], %12 {strides = array<i32>} : memref<1x6x1xf32, #tpu.memory_space<vmem>>, vector<1x6x1xf32>,
    %13 = arith.addf %5, %6 : vector<6x256xf32>
    %cst_7 = arith.constant dense<0.000000e+00> : vector<6xf32>
    %14 = vector.multi_reduction <add>, %13, %cst_7 [1] : vector<6x256xf32> to vector<6xf32>
    %15 = vector.shape_cast %14 : vector<6xf32> to vector<6x1xf32>
    %c0_8 = arith.constant 0 : index
    %c0_9 = arith.constant 0 : index
    %c0_10 = arith.constant 0 : index
    %16 = vector.load %arg4[%c0_8, %c0_9, %c0_10] : memref<1x6x1xf32, #tpu.memory_space<vmem>>, vector<1x6x1xf32>
    %17 = vector.shape_cast %16 : vector<1x6x1xf32> to vector<6x1xf32>
    %18 = vector.shape_cast %15 : vector<6x1xf32> to vector<1x6x1xf32>
    tpu.vector_store %arg4[%c0_8, %c0_9, %c0_10], %18 {strides = array<i32>} : memref<1x6x1xf32, #tpu.memory_space<vmem>>, vector<1x6x1xf32>,
    return
  }
  func.func @transform_0(%arg0: i32) -> (i32, i32) {
    %c0_i32 = arith.constant 0 : i32
    %c0_i32_0 = arith.constant 0 : i32
    return %c0_i32, %arg0 : i32, i32
  }
  func.func @transform_1(%arg0: i32) -> (i32, i32) {
    %c0_i32 = arith.constant 0 : i32
    %c0_i32_0 = arith.constant 0 : i32
    return %c0_i32, %arg0 : i32, i32
  }
  func.func @transform_2(%arg0: i32) -> (i32, i32, i32) {
    %c0_i32 = arith.constant 0 : i32
    %c0_i32_0 = arith.constant 0 : i32
    %c0_i32_1 = arith.constant 0 : i32
    return %arg0, %c0_i32, %c0_i32_0 : i32, i32, i32
  }
  func.func @transform_3(%arg0: i32) -> (i32, i32, i32) {
    %c0_i32 = arith.constant 0 : i32
    %c0_i32_0 = arith.constant 0 : i32
    %c0_i32_1 = arith.constant 0 : i32
    return %arg0, %c0_i32, %c0_i32_0 : i32, i32, i32
  }
}

</mosaic_0001>

<llo_original>
// kernel: tpu_custom_call.1
$region0: #{tpu_custom_call.1}
  #allocation0 [shape = 'u32[]', space=smem, size = 0x4, offset = 0x4, fixed_abs, tag = 'smem constant byte address 0x4 - core index']
  #allocation1 [shape = 'u32[144,128]{1,0:T(1,128)}', space=vmem, size = 0x12000, scoped, tag = 'internal scratch']
  %s0 = inlined_call_operand.hbm [shape: f32[6,256], index: 0, kind: input, shape index: {}]
  %s1 = inlined_call_operand.hbm [shape: f32[6,256], index: 1, kind: input, shape index: {}]
  %s2 = inlined_call_operand.vmem [shape: f32[1,6,1], index: 2, kind: output, shape index: {0}]
  %s3 = inlined_call_operand.vmem [shape: f32[1,6,1], index: 3, kind: output, shape index: {1}]
  %4 = xla_tuple %s2, %s3
  %s5 = sld [smem:[#allocation0]]
  $region34: #{tpu_custom_call.1} parent=0
    _
  %s7 = ssub.s32 1, %s5
  %s8 = scalar_select 0, %s7, %s5
  $region1: #{tpu_custom_call.1} parent=0
    #allocation2 [shape = 'u8[8192]{0}', space=vmem, size = 0x2000, scoped, tag = 'input window, operand 0, single buffered']
    #allocation3 [shape = 's32[1]{0}', space=sflag, size = 0x4, scoped, tag = 'scoped memory for tpu_custom_call.1']
    #allocation4 [shape = 'u8[8192]{0}', space=vmem, size = 0x2000, scoped, tag = 'input window, operand 1, single buffered']
    #allocation5 [shape = 's32[1]{0}', space=sflag, size = 0x4, scoped, tag = 'scoped memory for tpu_custom_call.1']
    %9 = vsyncpa [#allocation3], 0
    %10 = vsyncpa [#allocation5], 0
    // Predicated region
    $region2: #{tpu_custom_call.1} parent=1 // pred_check
      _
    $region3: #{tpu_custom_call.1} parent=1 // pred_check_branch
      %12 = sbr.rel (0) target = $region5
    $region4: #{tpu_custom_call.1} parent=1 // pred_region
      %s14 = ssub.s32 256, 256
      %15 = vsyncadd [#allocation3], %s14
      %s17 = sshll.u32 [#allocation2], 4
      %s18 = int_to_ptr.vmem [resolvable:$true] %s17
      %20 = dma.hbm_to_vmem [thread:$0]  %s0, 256, %s18, [#allocation3]
    $region5: #{tpu_custom_call.1} parent=1 // pred_fallthru
      _
    // Predicated region
    $region6: #{tpu_custom_call.1} parent=1 // pred_check
      _
    $region7: #{tpu_custom_call.1} parent=1 // pred_check_branch
      %22 = sbr.rel (0) target = $region9
    $region8: #{tpu_custom_call.1} parent=1 // pred_region
      %s24 = ssub.s32 256, 256
      %25 = vsyncadd [#allocation5], %s24
      %s27 = sshll.u32 [#allocation4], 4
      %s28 = int_to_ptr.vmem [resolvable:$true] %s27
      %30 = dma.hbm_to_vmem [thread:$0]  %s1, 256, %s28, [#allocation5]
    $region9: #{tpu_custom_call.1} parent=1 // pred_fallthru
      _
    // Predicated region
    $region10: #{tpu_custom_call.1} parent=1 // pred_check
      _
    $region11: #{tpu_custom_call.1} parent=1 // pred_check_branch
      %32 = sbr.rel (0) target = $region13
    $region12: #{tpu_custom_call.1} parent=1 // pred_region
      %33 = dma.done [#allocation3], 256
    $region13: #{tpu_custom_call.1} parent=1 // pred_fallthru
      _
    // Predicated region
    $region14: #{tpu_custom_call.1} parent=1 // pred_check
      _
    $region15: #{tpu_custom_call.1} parent=1 // pred_check_branch
      %35 = sbr.rel (0) target = $region17
    $region16: #{tpu_custom_call.1} parent=1 // pred_region
      %36 = dma.done [#allocation5], 256
    $region17: #{tpu_custom_call.1} parent=1 // pred_fallthru
      _
    %v37 = vld [vmem:[#allocation2] sm:$0x3f]
    %v38 = vld [vmem:[#allocation2 + $0x8] sm:$0x3f]
    %v39 = vxor.u32 %v37, 2147483648
    %v40 = vxor.u32 %v38, 2147483648
    %v41 = vmul.f32 %v39, 1.442695
    %v42 = vpow.pop %v41
    %v43 = vmul.f32 %v40, 1.442695
    %v44 = vpow.pop %v43
    %v45 = vadd.f32 %v42, 1.0
    %v46 = vadd.f32 %v44, 1.0
    %v47 = vrcp.pop %v45
    %v48 = vmul.f32 1.0, %v47
    %v49 = vrcp.pop %v46
    %v50 = vmul.f32 1.0, %v49
    %v51 = vld [vmem:[#allocation4] sm:$0x3f]
    %v52 = vld [vmem:[#allocation4 + $0x8] sm:$0x3f]
    %v53 = vmul.f32 %v48, %v51
    %v54 = vmul.f32 %v50, %v52
    %vm55 = vcmask 1045504
    %v56 = vsel %vm55, %v53, 0.0
    %v57 = vsel %vm55, %v54, 0.0
    %v58 = vadd.f32 %v56, %v57
    %59 = vadd.xlane.f32.xlu0 %v58
    %v60 = vpop.xlane.xlu0 %59
    %vm61 = vcmask 5120
    %62 = vst.msk [vmem:[%s2] sm:$0x3f] %vm61, %v60
    %v63 = vadd.f32 %v48, %v51
    %v64 = vadd.f32 %v50, %v52
    %v65 = vsel %vm55, %v63, 0.0
    %v66 = vsel %vm55, %v64, 0.0
    %v67 = vadd.f32 %v65, %v66
    %68 = vadd.xlane.f32.xlu0 %v67
    %v69 = vpop.xlane.xlu0 %68
    %70 = vst.msk [vmem:[%s3] sm:$0x3f] %vm61, %v69
    // Predicated region
    $region18: #{tpu_custom_call.1} parent=1 // pred_check
      _
    $region19: #{tpu_custom_call.1} parent=1 // pred_check_branch
      %72 = sbr.rel (0) target = $region21
    $region20: #{tpu_custom_call.1} parent=1 // pred_region
      _
    $region21: #{tpu_custom_call.1} parent=1 // pred_fallthru
      _
    // Predicated region
    $region22: #{tpu_custom_call.1} parent=1 // pred_check
      _
    $region23: #{tpu_custom_call.1} parent=1 // pred_check_branch
      %74 = sbr.rel (0) target = $region25
    $region24: #{tpu_custom_call.1} parent=1 // pred_region
      _
    $region25: #{tpu_custom_call.1} parent=1 // pred_fallthru
      _
    // Predicated region
    $region26: #{tpu_custom_call.1} parent=1 // pred_check
      _
    $region27: #{tpu_custom_call.1} parent=1 // pred_check_branch
      %76 = sbr.rel (0) target = $region29
    $region28: #{tpu_custom_call.1} parent=1 // pred_region
      _
    $region29: #{tpu_custom_call.1} parent=1 // pred_fallthru
      _
    // Predicated region
    $region30: #{tpu_custom_call.1} parent=1 // pred_check
      _
    $region31: #{tpu_custom_call.1} parent=1 // pred_check_branch
      %78 = sbr.rel (0) target = $region33
    $region32: #{tpu_custom_call.1} parent=1 // pred_region
      _
    $region33: #{tpu_custom_call.1} parent=1 // pred_fallthru
      _
    %79 = vsyncpa [#allocation3], 1
    %80 = vsyncpa [#allocation5], 1

</llo_original>
